<compile_context>
chip_gen: v7x
topology: tpu7x:2x2x1
jax: 0.10.0
libtpu: 0.0.40
codegen_flags: <defaults>
</compile_context>

<pallas_src>
import functools

import jax
import jax.numpy as jnp
from jax.experimental import pallas as pl
from jax.experimental.pallas import tpu as pltpu

EPS = 1e-5   # PyTorch BatchNorm2d default


def _pick_batch_tile(n, hw, target_lanes=4096):
    """Samples per grid step: pack boards up to ~target_lanes lanes, keep >= 2 steps."""
    best = 1
    for d in range(1, n + 1):
        if n % d:
            continue
        if d * hw > target_lanes:
            continue
        if n >= 2 and n // d < 2:
            continue
        best = d
    return best


def _build_xcol(xb, lmask, rmask, H, W):
    """Rebuild the (9*Cin, H*W) im2col tile of a 3x3 / padding=1 conv in VMEM.

    xb:    (Cin, L) bf16, flattened H*W activation with a (W+1) zero halo per side.
    lmask: (1, H*W) bf16, 0 where the output column has no left neighbour (x == 0)
    rmask: (1, H*W) bf16, 0 where it has no right neighbour (x == W-1)
    Row order is (tap dy, tap dx, cin), matching the folded (Cout, 9*Cin) weights.
    """
    HW = H * W
    halo = W + 1
    taps = []
    for dy in (-1, 0, 1):
        for dx in (-1, 0, 1):
            start = halo + dy * W + dx          # static lane offset
            tap = xb[:, start:start + HW]
            if dx == -1:
                tap = tap * lmask
            elif dx == 1:
                tap = tap * rmask
            taps.append(tap)
    return jnp.concatenate(taps, axis=0)        # (9*Cin, HW)


def conv_gram_kernel(x_ref, mask_ref, stats_ref, *, H, W):
    """Pass 1: augmented Gram statistics on the MXU.

    x_ref:     (BT, Cin, L)   bf16
    mask_ref:  (2, H*W)       bf16  column-edge masks (resident)
    stats_ref: (1, K+1, K+1)  f32   [xcol; 1][xcol; 1]^T summed over the batch tile
    """
    m = mask_ref[...]
    lmask, rmask = m[0:1, :], m[1:2, :]
    acc = None
    for b in range(x_ref.shape[0]):
        xcol = _build_xcol(x_ref[b], lmask, rmask, H, W)
        ones = jnp.ones((1, xcol.shape[1]), xcol.dtype)
        xa = jnp.concatenate([xcol, ones], axis=0)                    # (K+1, HW)
        g = jnp.dot(xa, xa.T, preferred_element_type=jnp.float32)     # (K+1, K+1)
        acc = g if acc is None else acc + g
    stats_ref[0] = acc


def conv_bn_relu_kernel(w_ref, scale_ref, shift_ref, x_ref, mask_ref, o_ref, *, H, W):
    """Pass 2: conv (recomputed) + folded BatchNorm affine + ReLU, lane-dense out.

    w_ref:     (Cout, 9*Cin)  bf16  folded 3x3 weights (resident)
    scale_ref: (Cout, 1)      f32   gamma * rsqrt(var + eps)
    shift_ref: (Cout, 1)      f32   beta - mean * scale
    x_ref:     (BT, Cin, L)   bf16
    mask_ref:  (2, H*W)       bf16
    o_ref:     (BT, Cout, H*W)      output tile (f32 or bf16)
    """
    m = mask_ref[...]
    lmask, rmask = m[0:1, :], m[1:2, :]
    w = w_ref[...]
    scale = scale_ref[...]
    shift = shift_ref[...]
    for b in range(x_ref.shape[0]):
        xcol = _build_xcol(x_ref[b], lmask, rmask, H, W)
        conv = jnp.dot(w, xcol, preferred_element_type=jnp.float32)   # (Cout, HW)
        o_ref[b] = jnp.maximum(conv * scale + shift, 0.0).astype(o_ref.dtype)


@functools.partial(jax.jit, static_argnames=("out_dtype",))
def conv_layer_forward(x_nchw, w_oihw, gamma, beta, out_dtype=jnp.float32):
    """x_nchw: (N, 2, H, W) f32.  Returns (N, n_kernel, H, W) in out_dtype (NCHW)."""
    N, Cin, H, W = x_nchw.shape
    Cout, _, KH, KW = w_oihw.shape
    assert (KH, KW) == (3, 3), "kernel specialised to 3x3 / padding=1"
    K = 9 * Cin
    K1 = K + 1
    HW = H * W
    M = N * HW
    halo = W + 1
    L = HW + 2 * halo

    # Compact bf16 activation: per-sample flattened H*W with a (W+1) zero halo.
    # (cast to bf16 BEFORE any layout work; no im2col materialised in HBM)
    x_ext = jnp.pad(x_nchw.astype(jnp.bfloat16).reshape(N, Cin, HW),
                    ((0, 0), (0, 0), (halo, halo)))

    # (Cout, Cin, 3, 3) -> (Cout, 3, 3, Cin) -> (Cout, 9*Cin): rows match xcol order.
    w2 = jnp.transpose(w_oihw, (0, 2, 3, 1)).reshape(Cout, K).astype(jnp.bfloat16)

    # Column-edge masks for the dx = -1 / dx = +1 taps (flat layout has no column pad).
    col = jnp.arange(HW, dtype=jnp.int32) % W
    edge_mask = jnp.stack([col != 0, col != W - 1]).astype(jnp.bfloat16)   # (2, HW)

    BT = _pick_batch_tile(N, HW)
    steps = N // BT
    parallel = pltpu.CompilerParams(dimension_semantics=("parallel",))

    # ---- pass 1: per-batch-tile augmented Gram statistics (MXU only) ----
    stats = pl.pallas_call(
        functools.partial(conv_gram_kernel, H=H, W=W),
        out_shape=jax.ShapeDtypeStruct((steps, K1, K1), jnp.float32),
        grid=(steps,),
        in_specs=[
            pl.BlockSpec((BT, Cin, L), lambda i: (i, 0, 0)),
            pl.BlockSpec((2, HW), lambda i: (0, 0)),
        ],
        out_specs=pl.BlockSpec((1, K1, K1), lambda i: (i, 0, 0)),
        compiler_params=parallel,
    )(x_ext, edge_mask)

    # ---- tiny fp32 combine: GLOBAL batch stats over (N,H,W), folded into scale/shift ----
    g_aug = jnp.sum(stats, axis=0)                  # (K+1, K+1)
    g = g_aug[:K, :K]                               # sum_m xcol xcol^T
    s = g_aug[:K, K]                                # sum_m xcol
    wf = w2.astype(jnp.float32)                     # the bf16-rounded weights, in f32
    count = jnp.float32(M)
    mean = (wf @ s) / count                                       # (Cout,)
    ex2 = jnp.sum((wf @ g) * wf, axis=1) / count                  # (Cout,) E[conv^2]
    var = jnp.maximum(ex2 - mean * mean, 0.0)                     # biased var (BN training)
    scale_vec = gamma * jax.lax.rsqrt(var + EPS)
    shift_vec = beta - mean * scale_vec
    scale2 = scale_vec.reshape(Cout, 1).astype(jnp.float32)
    shift2 = shift_vec.reshape(Cout, 1).astype(jnp.float32)
    # TODO(synk): BatchNorm running_mean / running_var buffer updates are not modelled
    # (the forward output uses batch statistics exactly as PyTorch training mode does).

    # ---- pass 2: conv recompute + folded BN + ReLU; tiles land directly in (N,Cout,H*W) ----
    out_flat = pl.pallas_call(
        functools.partial(conv_bn_relu_kernel, H=H, W=W),
        out_shape=jax.ShapeDtypeStruct((N, Cout, HW), out_dtype),
        grid=(steps,),
        in_specs=[
            pl.BlockSpec((Cout, K), lambda i: (0, 0)),
            pl.BlockSpec((Cout, 1), lambda i: (0, 0)),
            pl.BlockSpec((Cout, 1), lambda i: (0, 0)),
            pl.BlockSpec((BT, Cin, L), lambda i: (i, 0, 0)),
            pl.BlockSpec((2, HW), lambda i: (0, 0)),
        ],
        out_specs=pl.BlockSpec((BT, Cout, HW), lambda i: (i, 0, 0)),
        compiler_params=parallel,
    )(w2, scale2, shift2, x_ext, edge_mask)

    return out_flat.reshape(N, Cout, H, W)          # free reshape; already NCHW order


def _reference(x_nchw, w_oihw, gamma, beta):
    """Pure-JAX reference with the PyTorch-module semantics (training-mode BN)."""
    conv = jax.lax.conv_general_dilated(
        x_nchw, w_oihw, window_strides=(1, 1), padding=((1, 1), (1, 1)),
        dimension_numbers=("NCHW", "OIHW", "NCHW"))
    mean = jnp.mean(conv, axis=(0, 2, 3), keepdims=True)
    var = jnp.mean((conv - mean) ** 2, axis=(0, 2, 3), keepdims=True)
    y = (conv - mean) * jax.lax.rsqrt(var + EPS)
    y = y * gamma.reshape(1, -1, 1, 1) + beta.reshape(1, -1, 1, 1)
    return jnp.maximum(y, 0.0)


if __name__ == "__main__":
    n_kernel = 8
    N, Cin, H, W = 2, 2, 16, 16

    key = jax.random.PRNGKey(0)
    kx, kw, kg, kb = jax.random.split(key, 4)

    x = jax.random.normal(kx, (N, Cin, H, W), dtype=jnp.float32)
    # Conv2d weight (out_ch, in_ch, 3, 3), no bias (bias=False).
    w = 0.1 * jax.random.normal(kw, (n_kernel, Cin, 3, 3), dtype=jnp.float32)
    # BatchNorm2d affine parameters (non-trivial to exercise the folded affine path).
    gamma = 1.0 + 0.1 * jax.random.normal(kg, (n_kernel,), dtype=jnp.float32)
    beta = 0.1 * jax.random.normal(kb, (n_kernel,), dtype=jnp.float32)

    out = conv_layer_forward(x, w, gamma, beta)
    out = jax.block_until_ready(out)
    assert out.shape == (N, n_kernel, H, W)
    assert out.dtype == jnp.float32

    # Exact-pipeline check: same bf16-quantised MXU operands, fp32 math -> tight tol.
    xq = x.astype(jnp.bfloat16).astype(jnp.float32)
    wq = w.astype(jnp.bfloat16).astype(jnp.float32)
    ref_q = _reference(xq, wq, gamma, beta)
    assert jnp.allclose(out, ref_q, atol=1e-3, rtol=1e-3), "mismatch vs bf16-operand reference"

    # Semantic sanity check vs the full-fp32 PyTorch-equivalent reference
    # (looser tolerance accounts only for the deliberate bf16 operand cast).
    ref = _reference(x, w, gamma, beta)
    assert jnp.allclose(out, ref, atol=5e-2, rtol=5e-2), "mismatch vs fp32 reference"

    print("KERNEL_OK")
</pallas_src>

<mosaic_0001>
module attributes {stable_mosaic.version = 11 : i64} {
  func.func @conv_gram_kernel(%arg0: i32, %arg1: memref<1x2x290xbf16, #tpu.memory_space<vmem>>, %arg2: memref<2x256xbf16, #tpu.memory_space<vmem>>, %arg3: memref<1x19x19xf32, #tpu.memory_space<vmem>>) attributes {dimension_semantics = [#tpu.dimension_semantics<parallel>], iteration_bounds = array<i64: 2>, scalar_prefetch = 0 : i64, scratch_operands = 0 : i64, tpu.core_type = #tpu.core_type<tc>, window_params = [{transform_indices = @transform_0, window_bounds = array<i64: 1, 2, 290>}, {pipeline_mode = #tpu.pipeline_mode<synchronous>, transform_indices = @transform_1, window_bounds = array<i64: 2, 256>}, {transform_indices = @transform_2, window_bounds = array<i64: 1, 19, 19>}]} {
    %c0 = arith.constant 0 : index
    %c0_0 = arith.constant 0 : index
    %0 = vector.load %arg2[%c0, %c0_0] : memref<2x256xbf16, #tpu.memory_space<vmem>>, vector<2x256xbf16>
    %1 = vector.extract_strided_slice %0 {offsets = [0, 0], sizes = [1, 256], strides = [1, 1]} : vector<2x256xbf16> to vector<1x256xbf16>
    %2 = vector.extract_strided_slice %0 {offsets = [1, 0], sizes = [1, 256], strides = [1, 1]} : vector<2x256xbf16> to vector<1x256xbf16>
    %c0_1 = arith.constant 0 : index
    %c0_2 = arith.constant 0 : index
    %c0_3 = arith.constant 0 : index
    %3 = vector.load %arg1[%c0_1, %c0_2, %c0_3] : memref<1x2x290xbf16, #tpu.memory_space<vmem>>, vector<1x2x290xbf16>
    %4 = vector.shape_cast %3 : vector<1x2x290xbf16> to vector<2x290xbf16>
    %5 = vector.extract_strided_slice %4 {offsets = [0, 0], sizes = [2, 256], strides = [1, 1]} : vector<2x290xbf16> to vector<2x256xbf16>
    %6 = vector.broadcast %1 : vector<1x256xbf16> to vector<2x256xbf16>
    %7 = arith.mulf %5, %6 : vector<2x256xbf16>
    %8 = vector.extract_strided_slice %4 {offsets = [0, 1], sizes = [2, 256], strides = [1, 1]} : vector<2x290xbf16> to vector<2x256xbf16>
    %9 = vector.extract_strided_slice %4 {offsets = [0, 2], sizes = [2, 256], strides = [1, 1]} : vector<2x290xbf16> to vector<2x256xbf16>
    %10 = vector.broadcast %2 : vector<1x256xbf16> to vector<2x256xbf16>
    %11 = arith.mulf %9, %10 : vector<2x256xbf16>
    %12 = vector.extract_strided_slice %4 {offsets = [0, 16], sizes = [2, 256], strides = [1, 1]} : vector<2x290xbf16> to vector<2x256xbf16>
    %13 = vector.broadcast %1 : vector<1x256xbf16> to vector<2x256xbf16>
    %14 = arith.mulf %12, %13 : vector<2x256xbf16>
    %15 = vector.extract_strided_slice %4 {offsets = [0, 17], sizes = [2, 256], strides = [1, 1]} : vector<2x290xbf16> to vector<2x256xbf16>
    %16 = vector.extract_strided_slice %4 {offsets = [0, 18], sizes = [2, 256], strides = [1, 1]} : vector<2x290xbf16> to vector<2x256xbf16>
    %17 = vector.broadcast %2 : vector<1x256xbf16> to vector<2x256xbf16>
    %18 = arith.mulf %16, %17 : vector<2x256xbf16>
    %19 = vector.extract_strided_slice %4 {offsets = [0, 32], sizes = [2, 256], strides = [1, 1]} : vector<2x290xbf16> to vector<2x256xbf16>
    %20 = vector.broadcast %1 : vector<1x256xbf16> to vector<2x256xbf16>
    %21 = arith.mulf %19, %20 : vector<2x256xbf16>
    %22 = vector.extract_strided_slice %4 {offsets = [0, 33], sizes = [2, 256], strides = [1, 1]} : vector<2x290xbf16> to vector<2x256xbf16>
    %23 = vector.extract_strided_slice %4 {offsets = [0, 34], sizes = [2, 256], strides = [1, 1]} : vector<2x290xbf16> to vector<2x256xbf16>
    %24 = vector.broadcast %2 : vector<1x256xbf16> to vector<2x256xbf16>
    %25 = arith.mulf %23, %24 : vector<2x256xbf16>
    %26 = tpu.concatenate %7, %8, %11, %14, %15, %18, %21, %22, %25 in 0 : vector<2x256xbf16>, vector<2x256xbf16>, vector<2x256xbf16>, vector<2x256xbf16>, vector<2x256xbf16>, vector<2x256xbf16>, vector<2x256xbf16>, vector<2x256xbf16>, vector<2x256xbf16> -> vector<18x256xbf16>
    %cst = arith.constant 1.000000e+00 : bf16
    %27 = vector.broadcast %cst : bf16 to vector<1x256xbf16>
    %28 = tpu.concatenate %26, %27 in 0 : vector<18x256xbf16>, vector<1x256xbf16> -> vector<19x256xbf16>
    %29 = tpu.transpose %28, [1, 0] : vector<19x256xbf16> -> vector<256x19xbf16>
    %cst_4 = arith.constant dense<0.000000e+00> : vector<19x19xf32>
    %30 = tpu.matmul %28, %29, %cst_4 {dimension_numbers = #tpu.dot_dimension_numbers<[1], [0], [0], [1], [0, 0, 1, 1], [], []>} : vector<19x256xbf16>, vector<256x19xbf16>, vector<19x19xf32> -> vector<19x19xf32>
    %c0_5 = arith.constant 0 : index
    %c0_6 = arith.constant 0 : index
    %c0_7 = arith.constant 0 : index
    %31 = vector.load %arg3[%c0_5, %c0_6, %c0_7] : memref<1x19x19xf32, #tpu.memory_space<vmem>>, vector<1x19x19xf32>
    %32 = vector.shape_cast %31 : vector<1x19x19xf32> to vector<19x19xf32>
    %33 = vector.shape_cast %30 : vector<19x19xf32> to vector<1x19x19xf32>
    tpu.vector_store %arg3[%c0_5, %c0_6, %c0_7], %33 {strides = array<i32>} : memref<1x19x19xf32, #tpu.memory_space<vmem>>, vector<1x19x19xf32>,
    return
  }
  func.func @transform_0(%arg0: i32) -> (i32, i32, i32) {
    %c0_i32 = arith.constant 0 : i32
    %c0_i32_0 = arith.constant 0 : i32
    %c0_i32_1 = arith.constant 0 : i32
    return %arg0, %c0_i32, %c0_i32_0 : i32, i32, i32
  }
  func.func @transform_1(%arg0: i32) -> (i32, i32) {
    %c0_i32 = arith.constant 0 : i32
    %c0_i32_0 = arith.constant 0 : i32
    %c0_i32_1 = arith.constant 0 : i32
    return %c0_i32, %c0_i32_0 : i32, i32
  }
  func.func @transform_2(%arg0: i32) -> (i32, i32, i32) {
    %c0_i32 = arith.constant 0 : i32
    %c0_i32_0 = arith.constant 0 : i32
    %c0_i32_1 = arith.constant 0 : i32
    return %arg0, %c0_i32, %c0_i32_0 : i32, i32, i32
  }
}

module attributes {stable_mosaic.version = 11 : i64} {
  func.func @conv_bn_relu_kernel(%arg0: i32, %arg1: memref<8x18xbf16, #tpu.memory_space<vmem>>, %arg2: memref<8x1xf32, #tpu.memory_space<vmem>>, %arg3: memref<8x1xf32, #tpu.memory_space<vmem>>, %arg4: memref<1x2x290xbf16, #tpu.memory_space<vmem>>, %arg5: memref<2x256xbf16, #tpu.memory_space<vmem>>, %arg6: memref<1x8x256xf32, #tpu.memory_space<vmem>>) attributes {dimension_semantics = [#tpu.dimension_semantics<parallel>], iteration_bounds = array<i64: 2>, scalar_prefetch = 0 : i64, scratch_operands = 0 : i64, tpu.core_type = #tpu.core_type<tc>, window_params = [{pipeline_mode = #tpu.pipeline_mode<synchronous>, transform_indices = @transform_0, window_bounds = array<i64: 8, 18>}, {pipeline_mode = #tpu.pipeline_mode<synchronous>, transform_indices = @transform_1, window_bounds = array<i64: 8, 1>}, {pipeline_mode = #tpu.pipeline_mode<synchronous>, transform_indices = @transform_2, window_bounds = array<i64: 8, 1>}, {transform_indices = @transform_3, window_bounds = array<i64: 1, 2, 290>}, {pipeline_mode = #tpu.pipeline_mode<synchronous>, transform_indices = @transform_4, window_bounds = array<i64: 2, 256>}, {transform_indices = @transform_5, window_bounds = array<i64: 1, 8, 256>}]} {
    %c0 = arith.constant 0 : index
    %c0_0 = arith.constant 0 : index
    %0 = vector.load %arg5[%c0, %c0_0] : memref<2x256xbf16, #tpu.memory_space<vmem>>, vector<2x256xbf16>
    %1 = vector.extract_strided_slice %0 {offsets = [0, 0], sizes = [1, 256], strides = [1, 1]} : vector<2x256xbf16> to vector<1x256xbf16>
    %2 = vector.extract_strided_slice %0 {offsets = [1, 0], sizes = [1, 256], strides = [1, 1]} : vector<2x256xbf16> to vector<1x256xbf16>
    %c0_1 = arith.constant 0 : index
    %c0_2 = arith.constant 0 : index
    %3 = vector.load %arg1[%c0_1, %c0_2] : memref<8x18xbf16, #tpu.memory_space<vmem>>, vector<8x18xbf16>
    %c0_3 = arith.constant 0 : index
    %c0_4 = arith.constant 0 : index
    %4 = vector.load %arg2[%c0_3, %c0_4] : memref<8x1xf32, #tpu.memory_space<vmem>>, vector<8x1xf32>
    %c0_5 = arith.constant 0 : index
    %c0_6 = arith.constant 0 : index
    %5 = vector.load %arg3[%c0_5, %c0_6] : memref<8x1xf32, #tpu.memory_space<vmem>>, vector<8x1xf32>
    %c0_7 = arith.constant 0 : index
    %c0_8 = arith.constant 0 : index
    %c0_9 = arith.constant 0 : index
    %6 = vector.load %arg4[%c0_7, %c0_8, %c0_9] : memref<1x2x290xbf16, #tpu.memory_space<vmem>>, vector<1x2x290xbf16>
    %7 = vector.shape_cast %6 : vector<1x2x290xbf16> to vector<2x290xbf16>
    %8 = vector.extract_strided_slice %7 {offsets = [0, 0], sizes = [2, 256], strides = [1, 1]} : vector<2x290xbf16> to vector<2x256xbf16>
    %9 = vector.broadcast %1 : vector<1x256xbf16> to vector<2x256xbf16>
    %10 = arith.mulf %8, %9 : vector<2x256xbf16>
    %11 = vector.extract_strided_slice %7 {offsets = [0, 1], sizes = [2, 256], strides = [1, 1]} : vector<2x290xbf16> to vector<2x256xbf16>
    %12 = vector.extract_strided_slice %7 {offsets = [0, 2], sizes = [2, 256], strides = [1, 1]} : vector<2x290xbf16> to vector<2x256xbf16>
    %13 = vector.broadcast %2 : vector<1x256xbf16> to vector<2x256xbf16>
    %14 = arith.mulf %12, %13 : vector<2x256xbf16>
    %15 = vector.extract_strided_slice %7 {offsets = [0, 16], sizes = [2, 256], strides = [1, 1]} : vector<2x290xbf16> to vector<2x256xbf16>
    %16 = vector.broadcast %1 : vector<1x256xbf16> to vector<2x256xbf16>
    %17 = arith.mulf %15, %16 : vector<2x256xbf16>
    %18 = vector.extract_strided_slice %7 {offsets = [0, 17], sizes = [2, 256], strides = [1, 1]} : vector<2x290xbf16> to vector<2x256xbf16>
    %19 = vector.extract_strided_slice %7 {offsets = [0, 18], sizes = [2, 256], strides = [1, 1]} : vector<2x290xbf16> to vector<2x256xbf16>
    %20 = vector.broadcast %2 : vector<1x256xbf16> to vector<2x256xbf16>
    %21 = arith.mulf %19, %20 : vector<2x256xbf16>
    %22 = vector.extract_strided_slice %7 {offsets = [0, 32], sizes = [2, 256], strides = [1, 1]} : vector<2x290xbf16> to vector<2x256xbf16>
    %23 = vector.broadcast %1 : vector<1x256xbf16> to vector<2x256xbf16>
    %24 = arith.mulf %22, %23 : vector<2x256xbf16>
    %25 = vector.extract_strided_slice %7 {offsets = [0, 33], sizes = [2, 256], strides = [1, 1]} : vector<2x290xbf16> to vector<2x256xbf16>
    %26 = vector.extract_strided_slice %7 {offsets = [0, 34], sizes = [2, 256], strides = [1, 1]} : vector<2x290xbf16> to vector<2x256xbf16>
    %27 = vector.broadcast %2 : vector<1x256xbf16> to vector<2x256xbf16>
    %28 = arith.mulf %26, %27 : vector<2x256xbf16>
    %29 = tpu.concatenate %10, %11, %14, %17, %18, %21, %24, %25, %28 in 0 : vector<2x256xbf16>, vector<2x256xbf16>, vector<2x256xbf16>, vector<2x256xbf16>, vector<2x256xbf16>, vector<2x256xbf16>, vector<2x256xbf16>, vector<2x256xbf16>, vector<2x256xbf16> -> vector<18x256xbf16>
    %cst = arith.constant dense<0.000000e+00> : vector<8x256xf32>
    %30 = tpu.matmul %3, %29, %cst {dimension_numbers = #tpu.dot_dimension_numbers<[1], [0], [0], [1], [0, 0, 1, 1], [], []>} : vector<8x18xbf16>, vector<18x256xbf16>, vector<8x256xf32> -> vector<8x256xf32>
    %31 = vector.broadcast %4 : vector<8x1xf32> to vector<8x256xf32>
    %32 = arith.mulf %30, %31 : vector<8x256xf32>
    %33 = vector.broadcast %5 : vector<8x1xf32> to vector<8x256xf32>
    %34 = arith.addf %32, %33 : vector<8x256xf32>
    %cst_10 = arith.constant 0.000000e+00 : f32
    %35 = vector.broadcast %cst_10 : f32 to vector<8x256xf32>
    %36 = arith.maximumf %34, %35 : vector<8x256xf32>
    %c0_11 = arith.constant 0 : index
    %c0_12 = arith.constant 0 : index
    %c0_13 = arith.constant 0 : index
    %37 = vector.load %arg6[%c0_11, %c0_12, %c0_13] : memref<1x8x256xf32, #tpu.memory_space<vmem>>, vector<1x8x256xf32>
    %38 = vector.shape_cast %37 : vector<1x8x256xf32> to vector<8x256xf32>
    %39 = vector.shape_cast %36 : vector<8x256xf32> to vector<1x8x256xf32>
    tpu.vector_store %arg6[%c0_11, %c0_12, %c0_13], %39 {strides = array<i32>} : memref<1x8x256xf32, #tpu.memory_space<vmem>>, vector<1x8x256xf32>,
    return
  }
  func.func @transform_0(%arg0: i32) -> (i32, i32) {
    %c0_i32 = arith.constant 0 : i32
    %c0_i32_0 = arith.constant 0 : i32
    %c0_i32_1 = arith.constant 0 : i32
    return %c0_i32, %c0_i32_0 : i32, i32
  }
  func.func @transform_1(%arg0: i32) -> (i32, i32) {
    %c0_i32 = arith.constant 0 : i32
    %c0_i32_0 = arith.constant 0 : i32
    %c0_i32_1 = arith.constant 0 : i32
    return %c0_i32, %c0_i32_0 : i32, i32
  }
  func.func @transform_2(%arg0: i32) -> (i32, i32) {
    %c0_i32 = arith.constant 0 : i32
    %c0_i32_0 = arith.constant 0 : i32
    %c0_i32_1 = arith.constant 0 : i32
    return %c0_i32, %c0_i32_0 : i32, i32
  }
  func.func @transform_3(%arg0: i32) -> (i32, i32, i32) {
    %c0_i32 = arith.constant 0 : i32
    %c0_i32_0 = arith.constant 0 : i32
    %c0_i32_1 = arith.constant 0 : i32
    return %arg0, %c0_i32, %c0_i32_0 : i32, i32, i32
  }
  func.func @transform_4(%arg0: i32) -> (i32, i32) {
    %c0_i32 = arith.constant 0 : i32
    %c0_i32_0 = arith.constant 0 : i32
    %c0_i32_1 = arith.constant 0 : i32
    return %c0_i32, %c0_i32_0 : i32, i32
  }
  func.func @transform_5(%arg0: i32) -> (i32, i32, i32) {
    %c0_i32 = arith.constant 0 : i32
    %c0_i32_0 = arith.constant 0 : i32
    %c0_i32_1 = arith.constant 0 : i32
    return %arg0, %c0_i32, %c0_i32_0 : i32, i32, i32
  }
}

</mosaic_0001>

<llo_original>
// kernel: conv_layer_forward.2
$region0: #{conv_layer_forward.2}
  #allocation0 [shape = 'u32[]', space=smem, size = 0x4, offset = 0x4, fixed_abs, tag = 'smem constant byte address 0x4 - core index']
  #allocation1 [shape = 'u32[144,128]{1,0:T(1,128)}', space=vmem, size = 0x12000, scoped, tag = 'internal scratch']
  %s0 = inlined_call_operand.vmem [shape: bf16[2,2,290], index: 0, kind: input, shape index: {}]
  %s1 = inlined_call_operand.vmem [shape: bf16[2,256], index: 1, kind: input, shape index: {}]
  %s2 = inlined_call_operand.vmem [shape: f32[2,19,19], index: 2, kind: output, shape index: {}]
  %s3 = sld [smem:[#allocation0]]
  $region41: #{conv_layer_forward.2} parent=0
    _
  %s5 = ssub.s32 1, %s3
  %s6 = scalar_select 0, %s5, %s3
  loop: start=0, step=1, limit=4
  $region2: #{conv_layer_forward.2} parent=0 // loop_pre_header
    _
  $region3: #{conv_layer_forward.2} parent=0 // loop_header
    %s8 = sphi 0, %s12
    %p9 = scmp.ge.s32.totalorder %s8, 4
    %s18 = sphi 0, %s20
    %s21 = sphi 0, %s18
    %s22 = sphi 0, %s21
    %s38 = sphi 0, %s22
    %s42 = sphi 0, %s42
    %s44 = sphi 0, %s42
    %s45 = sphi 0, %s44
    %s59 = sphi 0, %s45
    %s65 = sphi 0, %s67
    %s68 = sphi 0, %s65
    %s69 = sphi 0, %s68
    %s85 = sphi 0, %s69
  $region4: #{conv_layer_forward.2} parent=0 // loop_header_branch
    %11 = sbr.rel (%p9) target = $region8
  $region5: #{conv_layer_forward.2} parent=0 // loop_body
    %s13 = ssub.s32 %s8, 1
    %s14 = ssub.s32 %s8, 2
    %s15 = sadd.s32 %s8, 1
    %s16 = ssub.s32 %s8, %s15
    %p17 = scmp.eq.s32.totalorder %s16, 0
    %s19 = sadd.s32 %s18, 1
    %s20 = scalar_select %p17, %s18, %s19
    %p23 = pneg %p17
    %p24 = scmp.eq.s32.totalorder %s8, 1
    %p25 = por %p23, %p24
    %p26 = scmp.ne.s32.totalorder %s18, %s21
    %p27 = scmp.eq.s32.totalorder %s8, 0
    %p28 = por %p26, %p27
    %p29 = scmp.ne.s32.totalorder %s18, %s21
    %p30 = scmp.eq.s32.totalorder %s13, 1
    %p31 = por %p29, %p30
    %p32 = scmp.ne.s32.totalorder %s21, %s22
    %p33 = scmp.eq.s32.totalorder %s13, 0
    %p34 = por %p32, %p33
    %p35 = scmp.ne.s32.totalorder %s21, %s22
    %p36 = scmp.eq.s32.totalorder %s14, 1
    %p37 = por %p35, %p36
    %p39 = scmp.ne.s32.totalorder %s22, %s38
    %p40 = scmp.eq.s32.totalorder %s14, 0
    %p41 = por %p39, %p40
    %s43 = sadd.s32 %s42, 1
    %p46 = scmp.eq.s32.totalorder %s8, 1
    %p47 = scmp.ne.s32.totalorder %s42, %s44
    %p48 = scmp.eq.s32.totalorder %s8, 0
    %p49 = por %p47, %p48
    %p50 = scmp.ne.s32.totalorder %s42, %s44
    %p51 = scmp.eq.s32.totalorder %s13, 1
    %p52 = por %p50, %p51
    %p53 = scmp.ne.s32.totalorder %s44, %s45
    %p54 = scmp.eq.s32.totalorder %s13, 0
    %p55 = por %p53, %p54
    %p56 = scmp.ne.s32.totalorder %s44, %s45
    %p57 = scmp.eq.s32.totalorder %s14, 1
    %p58 = por %p56, %p57
    %p60 = scmp.ne.s32.totalorder %s45, %s59
    %p61 = scmp.eq.s32.totalorder %s14, 0
    %p62 = por %p60, %p61
    %s63 = ssub.s32 %s8, %s15
    %p64 = scmp.eq.s32.totalorder %s63, 0
    %s66 = sadd.s32 %s65, 1
    %s67 = scalar_select %p64, %s65, %s66
    %p70 = pneg %p64
    %p71 = scmp.eq.s32.totalorder %s8, 1
    %p72 = por %p70, %p71
    %p73 = scmp.ne.s32.totalorder %s65, %s68
    %p74 = scmp.eq.s32.totalorder %s8, 0
    %p75 = por %p73, %p74
    %p76 = scmp.ne.s32.totalorder %s65, %s68
    %p77 = scmp.eq.s32.totalorder %s13, 1
    %p78 = por %p76, %p77
    %p79 = scmp.ne.s32.totalorder %s68, %s69
    %p80 = scmp.eq.s32.totalorder %s13, 0
    %p81 = por %p79, %p80
    %p82 = scmp.ne.s32.totalorder %s68, %s69
    %p83 = scmp.eq.s32.totalorder %s14, 1
    %p84 = por %p82, %p83
    %p86 = scmp.ne.s32.totalorder %s69, %s85
    %p87 = scmp.eq.s32.totalorder %s14, 0
    %p88 = por %p86, %p87
    %p89 = scmp.le.s32.totalorder 1, %s8
    %p90 = scmp.lt.s32.totalorder %s8, 3
    %p91 = pnand %p89, %p90
    %p92 = pneg %p91
    // Predicated region
    $region9: #{conv_layer_forward.2} parent=5 // pred_check
      _
    $region10: #{conv_layer_forward.2} parent=5 // pred_check_branch
      %94 = sbr.rel (%p91) target = $region12
    $region11: #{conv_layer_forward.2} parent=5 // pred_region
      %s95 = ssub.s32 %s8, 1
      // Predicated region
      $region13: #{conv_layer_forward.2} parent=11 // pred_check
        %p96 = pneg %p55
      $region14: #{conv_layer_forward.2} parent=11 // pred_check_branch
        %98 = sbr.rel (%p96) target = $region16
      $region15: #{conv_layer_forward.2} parent=11 // pred_region
        _
      $region16: #{conv_layer_forward.2} parent=11 // pred_fallthru
        _
    $region12: #{conv_layer_forward.2} parent=5 // pred_fallthru
      _
    %p99 = scmp.lt.s32.totalorder %s8, 2
    // Predicated region
    $region17: #{conv_layer_forward.2} parent=5 // pred_check
      %p100 = pneg %p99
    $region18: #{conv_layer_forward.2} parent=5 // pred_check_branch
      %102 = sbr.rel (%p100) target = $region20
    $region19: #{conv_layer_forward.2} parent=5 // pred_region
      // Predicated region
      $region21: #{conv_layer_forward.2} parent=19 // pred_check
        %p103 = pneg %p28
      $region22: #{conv_layer_forward.2} parent=19 // pred_check_branch
        %105 = sbr.rel (%p103) target = $region24
      $region23: #{conv_layer_forward.2} parent=19 // pred_region
        %p106 = scmp.lt.s32.totalorder %s8, 1
        %s107 = scalar_select %p106, %s8, 1
        %s108 = smul.addr %s107, 3
        %s109 = scalar_lea.vmem %s0, %s108
      $region24: #{conv_layer_forward.2} parent=19 // pred_fallthru
        _
    $region20: #{conv_layer_forward.2} parent=5 // pred_fallthru
      _
    %p110 = scmp.le.s32.totalorder 1, %s8
    %p111 = scmp.lt.s32.totalorder %s8, 3
    %p112 = pnand %p110, %p111
    %p113 = pneg %p112
    // Predicated region
    $region25: #{conv_layer_forward.2} parent=5 // pred_check
      _
    $region26: #{conv_layer_forward.2} parent=5 // pred_check_branch
      %115 = sbr.rel (%p112) target = $region28
    $region27: #{conv_layer_forward.2} parent=5 // pred_region
      %s116 = ssub.s32 %s8, 1
      %p117 = scmp.lt.s32.totalorder %s13, 1
      %s118 = scalar_select %p117, %s13, 1
      %s119 = smul.addr %s118, 3
      %s120 = scalar_lea.vmem %s0, %s119
      %p121 = pneg %p34
      %p122 = pneg %p31
      %p123 = pneg %p55
      %p124 = pneg %p52
      %p125 = pneg %p81
      %p126 = pneg %p78
      %p127 = scmp.lt.s32.totalorder %s13, 1
      %s128 = scalar_select %p127, %s13, 1
      %s129 = smul.addr %s128, 3
      %s130 = smul.addr %s129, 8
      %s131 = scalar_lea.vmem %s2, %s130
      %p132 = scmp.lt.s32.totalorder %s13, 1
      %s133 = scalar_select %p132, %s13, 1
      %s134 = smul.addr %s133, 3
      %s135 = scalar_lea.vmem %s0, %s134
      %p136 = scmp.lt.s32.totalorder %s13, 1
      %s137 = scalar_select %p136, %s13, 1
      %s138 = smul.addr %s137, 3
      %s139 = smul.addr %s138, 8
      %s140 = scalar_lea.vmem %s2, %s139
      %v143 = vld [vmem:[%s1] sm:$0x3]
      %v144 = vld [vmem:[%s135] sm:$0x7]
      %v147 = vunpack.c.l.s4 1966171168
      %v148 = vunpack.c.0.s8 %v147
      %v149 = vlaneseq
      %v150 = vshrl.u32 %v149, 7
      %v151 = vsub.s32 %v148, %v150
      %v152 = vrot.slane %v143, %v151
      %v153 = vcombine.high %v152, %v152
      %v155 = vunpack.c.l.s4 1966171168
      %v156 = vunpack.c.0.s8 %v155
      %v157 = vlaneseq
      %v158 = vshrl.u32 %v157, 7
      %v159 = vsub.s32 %v156, %v158
      %v160 = vrot.slane %v152, %v159
      %v162 = vunpack.c.l.s4 1966171168
      %v163 = vunpack.c.0.s8 %v162
      %v164 = vlaneseq
      %v165 = vshrl.u32 %v164, 7
      %v166 = vsub.s32 %v163, %v165
      %v167 = vrot.slane %v153, %v166
      %v169 = vpack.i.b16 %v160, %v160
      %v171 = vlaneseq
      %v172 = vshrl.u32 %v171, 7
      %v173 = vsub.s32 0, %v172
      %v174 = vrot.slane %v169, %v173
      %v176 = vpack.i.b16 %v167, %v167
      %v178 = vlaneseq
      %v179 = vshrl.u32 %v178, 7
      %v180 = vsub.s32 0, %v179
      %v181 = vrot.slane %v176, %v180
      %v184 = vcombine.low %v174, %v181
      %v186 = vunpack.c.l.s4 1966171168
      %v187 = vunpack.c.0.s8 %v186
      %v188 = vlaneseq
      %v189 = vshrl.u32 %v188, 7
      %v190 = vsub.s32 %v187, %v189
      %v191 = vrot.slane %v184, %v190
      %v193 = vunpack.c.l.s4 1966171168
      %v194 = vunpack.c.0.s8 %v193
      %v195 = vlaneseq
      %v196 = vshrl.u32 %v195, 7
      %v197 = vsub.s32 %v194, %v196
      %v198 = vrot.slane %v191, %v197
      %v200 = vmul.bf16 %v144, %v198
      %v201 = vshrl.u32 %v160, 16
      %v202 = vpack.i.b16 %v201, %v201
      %v204 = vlaneseq
      %v205 = vshrl.u32 %v204, 7
      %v206 = vsub.s32 0, %v205
      %v207 = vrot.slane %v202, %v206
      %v208 = vshrl.u32 %v167, 16
      %v209 = vpack.i.b16 %v208, %v208
      %v211 = vlaneseq
      %v212 = vshrl.u32 %v211, 7
      %v213 = vsub.s32 0, %v212
      %v214 = vrot.slane %v209, %v213
      %v217 = vcombine.low %v207, %v214
      %v219 = vunpack.c.l.s4 1966171168
      %v220 = vunpack.c.0.s8 %v219
      %v221 = vlaneseq
      %v222 = vshrl.u32 %v221, 7
      %v223 = vsub.s32 %v220, %v222
      %v224 = vrot.slane %v217, %v223
      %v226 = vunpack.c.l.s4 1966171168
      %v227 = vunpack.c.0.s8 %v226
      %v228 = vlaneseq
      %v229 = vshrl.u32 %v228, 7
      %v230 = vsub.s32 %v227, %v229
      %v231 = vrot.slane %v224, %v230
      %232 = vrot.lane.b32.xlu0 %v231, 2
      %v233 = vpop.permute.xlu0 %232
      %v234 = vrot.slane %v233, 7
      %vm235 = vcmask 15360
      %v236 = vsel %vm235, %v234, %v233
      %v238 = vmul.bf16 %v144, %v236
      %239 = vrot.lane.b32.xlu0 %v198, 16
      %v240 = vpop.permute.xlu0 %239
      %v241 = vrot.slane %v240, 7
      %vm242 = vcmask 130048
      %v243 = vsel %vm242, %v241, %v240
      %v245 = vmul.bf16 %v144, %v243
      %246 = vrot.lane.b32.xlu0 %v231, 18
      %v247 = vpop.permute.xlu0 %246
      %v248 = vrot.slane %v247, 7
      %vm249 = vcmask 146432
      %v250 = vsel %vm249, %v248, %v247
      %v252 = vmul.bf16 %v144, %v250
      %253 = vrot.lane.b32.xlu0 %v198, 32
      %v254 = vpop.permute.xlu0 %253
      %v255 = vrot.slane %v254, 7
      %vm256 = vcmask 261120
      %v257 = vsel %vm256, %v255, %v254
      %v259 = vmul.bf16 %v144, %v257
      %260 = vrot.lane.b32.xlu0 %v231, 34
      %v261 = vpop.permute.xlu0 %260
      %v262 = vrot.slane %v261, 7
      %vm263 = vcmask 277504
      %v264 = vsel %vm263, %v262, %v261
      %v266 = vmul.bf16 %v144, %v264
      %v269 = vunpack.c.l.s4 1966171168
      %v270 = vunpack.c.0.s8 %v269
      %v271 = vlaneseq
      %v272 = vshrl.u32 %v271, 7
      %v273 = vsub.s32 %v270, %v272
      %v274 = vrot.slane %v200, %v273
      %v275 = vcombine.high %v274, %v274
      %v277 = vunpack.c.l.s4 1966171168
      %v278 = vunpack.c.0.s8 %v277
      %v279 = vlaneseq
      %v280 = vshrl.u32 %v279, 7
      %v281 = vsub.s32 %v278, %v280
      %v282 = vrot.slane %v274, %v281
      %v284 = vunpack.c.l.s4 1966171168
      %v285 = vunpack.c.0.s8 %v284
      %v286 = vlaneseq
      %v287 = vshrl.u32 %v286, 7
      %v288 = vsub.s32 %v285, %v287
      %v289 = vrot.slane %v275, %v288
      %v291 = vcombine.low %v144, %v144
      %v293 = vunpack.c.l.s4 1966171168
      %v294 = vunpack.c.0.s8 %v293
      %v295 = vlaneseq
      %v296 = vshrl.u32 %v295, 7
      %v297 = vsub.s32 %v294, %v296
      %v298 = vrot.slane %v291, %v297
      %v300 = vunpack.c.l.s4 1966171168
      %v301 = vunpack.c.0.s8 %v300
      %v302 = vlaneseq
      %v303 = vshrl.u32 %v302, 7
      %v304 = vsub.s32 %v301, %v303
      %v305 = vrot.slane %v144, %v304
      %v306 = vcombine.high %v298, %v298
      %v308 = vunpack.c.l.s4 1966171168
      %v309 = vunpack.c.0.s8 %v308
      %v310 = vlaneseq
      %v311 = vshrl.u32 %v310, 7
      %v312 = vsub.s32 %v309, %v311
      %v313 = vrot.slane %v298, %v312
      %v315 = vunpack.c.l.s4 1966171168
      %v316 = vunpack.c.0.s8 %v315
      %v317 = vlaneseq
      %v318 = vshrl.u32 %v317, 7
      %v319 = vsub.s32 %v316, %v318
      %v320 = vrot.slane %v305, %v319
      %v322 = vunpack.c.l.s4 1966171168
      %v323 = vunpack.c.0.s8 %v322
      %v324 = vlaneseq
      %v325 = vshrl.u32 %v324, 7
      %v326 = vsub.s32 %v323, %v325
      %v327 = vrot.slane %v306, %v326
      %v328 = vcombine.high %v313, %v313
      %329 = vrot.lane.b32.xlu0 %v313, 127
      %v330 = vpop.permute.xlu0 %329
      %331 = vrot.lane.b32.xlu0 %v327, 127
      %v332 = vpop.permute.xlu0 %331
      %333 = vrot.lane.b32.xlu0 %v328, 127
      %v334 = vpop.permute.xlu0 %333
      %vm335 = vcmask 1039360
      %v336 = vsel %vm335, %v330, %v332
      %v337 = vsel %vm335, %v332, %v334
      %v340 = vunpack.c.l.s4 1966171168
      %v341 = vunpack.c.0.s8 %v340
      %v342 = vlaneseq
      %v343 = vshrl.u32 %v342, 7
      %v344 = vsub.s32 %v341, %v343
      %v345 = vrot.slane %v238, %v344
      %v346 = vcombine.low %v345, %v345
      %v348 = vunpack.c.l.s4 1966171168
      %v349 = vunpack.c.0.s8 %v348
      %v350 = vlaneseq
      %v351 = vshrl.u32 %v350, 7
      %v352 = vsub.s32 %v349, %v351
      %v353 = vrot.slane %v346, %v352
      %v355 = vunpack.c.l.s4 1966171168
      %v356 = vunpack.c.0.s8 %v355
      %v357 = vlaneseq
      %v358 = vshrl.u32 %v357, 7
      %v359 = vsub.s32 %v356, %v358
      %v360 = vrot.slane %v345, %v359
      %v361 = vcombine.high %v353, %v353
      %362 = vrot.lane.b32.xlu0 %v353, 126
      %v363 = vpop.permute.xlu0 %362
      %364 = vrot.lane.b32.xlu0 %v360, 126
      %v365 = vpop.permute.xlu0 %364
      %366 = vrot.lane.b32.xlu0 %v361, 126
      %v367 = vpop.permute.xlu0 %366
      %vm368 = vcmask 1031168
      %v369 = vsel %vm368, %v363, %v365
      %v370 = vsel %vm368, %v365, %v367
      %v372 = vcombine.low %v245, %v245
      %v374 = vunpack.c.l.s4 1966171168
      %v375 = vunpack.c.0.s8 %v374
      %v376 = vlaneseq
      %v377 = vshrl.u32 %v376, 7
      %v378 = vsub.s32 %v375, %v377
      %v379 = vrot.slane %v372, %v378
      %v380 = vcombine.low %v379, %v379
      %v382 = vunpack.c.l.s4 1966171168
      %v383 = vunpack.c.0.s8 %v382
      %v384 = vlaneseq
      %v385 = vshrl.u32 %v384, 7
      %v386 = vsub.s32 %v383, %v385
      %v387 = vrot.slane %v380, %v386
      %v389 = vunpack.c.l.s4 1966171168
      %v390 = vunpack.c.0.s8 %v389
      %v391 = vlaneseq
      %v392 = vshrl.u32 %v391, 7
      %v393 = vsub.s32 %v390, %v392
      %v394 = vrot.slane %v379, %v393
      %v395 = vcombine.high %v387, %v387
      %396 = vrot.lane.b32.xlu0 %v387, 112
      %v397 = vpop.permute.xlu0 %396
      %398 = vrot.lane.b32.xlu0 %v394, 112
      %v399 = vpop.permute.xlu0 %398
      %400 = vrot.lane.b32.xlu0 %v395, 112
      %v401 = vpop.permute.xlu0 %400
      %vm402 = vcmask 916480
      %v403 = vsel %vm402, %v397, %v399
      %v404 = vsel %vm402, %v399, %v401
      %v405 = vcombine.high %v305, %v305
      %v407 = vunpack.c.l.s4 1966171168
      %v408 = vunpack.c.0.s8 %v407
      %v409 = vlaneseq
      %v410 = vshrl.u32 %v409, 7
      %v411 = vsub.s32 %v408, %v410
      %v412 = vrot.slane %v405, %v411
      %v413 = vcombine.low %v320, %v320
      %v414 = vcombine.low %v412, %v412
      %415 = vrot.lane.b32.xlu0 %v413, 111
      %v416 = vpop.permute.xlu0 %415
      %417 = vrot.lane.b32.xlu0 %v414, 111
      %v418 = vpop.permute.xlu0 %417
      %419 = vrot.lane.b32.xlu0 %v320, 111
      %v420 = vpop.permute.xlu0 %419
      %vm421 = vcmask 908288
      %v422 = vsel %vm421, %v416, %v418
      %v423 = vsel %vm421, %v418, %v420
      %v425 = vcombine.low %v252, %v252
      %v427 = vunpack.c.l.s4 1966171168
      %v428 = vunpack.c.0.s8 %v427
      %v429 = vlaneseq
      %v430 = vshrl.u32 %v429, 7
      %v431 = vsub.s32 %v428, %v430
      %v432 = vrot.slane %v425, %v431
      %v433 = vcombine.high %v432, %v432
      %v435 = vunpack.c.l.s4 1966171168
      %v436 = vunpack.c.0.s8 %v435
      %v437 = vlaneseq
      %v438 = vshrl.u32 %v437, 7
      %v439 = vsub.s32 %v436, %v438
      %v440 = vrot.slane %v432, %v439
      %v442 = vunpack.c.l.s4 1966171168
      %v443 = vunpack.c.0.s8 %v442
      %v444 = vlaneseq
      %v445 = vshrl.u32 %v444, 7
      %v446 = vsub.s32 %v443, %v445
      %v447 = vrot.slane %v433, %v446
      %v448 = vcombine.low %v440, %v440
      %v449 = vcombine.low %v447, %v447
      %450 = vrot.lane.b32.xlu0 %v448, 110
      %v451 = vpop.permute.xlu0 %450
      %452 = vrot.lane.b32.xlu0 %v449, 110
      %v453 = vpop.permute.xlu0 %452
      %454 = vrot.lane.b32.xlu0 %v440, 110
      %v455 = vpop.permute.xlu0 %454
      %vm456 = vcmask 900096
      %v457 = vsel %vm456, %v451, %v453
      %v458 = vsel %vm456, %v453, %v455
      %v461 = vunpack.c.l.s4 1966171168
      %v462 = vunpack.c.0.s8 %v461
      %v463 = vlaneseq
      %v464 = vshrl.u32 %v463, 7
      %v465 = vsub.s32 %v462, %v464
      %v466 = vrot.slane %v259, %v465
      %v467 = vcombine.low %v466, %v466
      %v469 = vunpack.c.l.s4 1966171168
      %v470 = vunpack.c.0.s8 %v469
      %v471 = vlaneseq
      %v472 = vshrl.u32 %v471, 7
      %v473 = vsub.s32 %v470, %v472
      %v474 = vrot.slane %v467, %v473
      %v476 = vunpack.c.l.s4 1966171168
      %v477 = vunpack.c.0.s8 %v476
      %v478 = vlaneseq
      %v479 = vshrl.u32 %v478, 7
      %v480 = vsub.s32 %v477, %v479
      %v481 = vrot.slane %v466, %v480
      %v482 = vcombine.low %v474, %v474
      %v483 = vcombine.low %v481, %v481
      %484 = vrot.lane.b32.xlu0 %v482, 96
      %v485 = vpop.permute.xlu0 %484
      %486 = vrot.lane.b32.xlu0 %v483, 96
      %v487 = vpop.permute.xlu0 %486
      %488 = vrot.lane.b32.xlu0 %v474, 96
      %v489 = vpop.permute.xlu0 %488
      %vm490 = vcmask 785408
      %v491 = vsel %vm490, %v485, %v487
      %v492 = vsel %vm490, %v487, %v489
      %v493 = vcombine.low %v298, %v298
      %v495 = vunpack.c.l.s4 1966171168
      %v496 = vunpack.c.0.s8 %v495
      %v497 = vlaneseq
      %v498 = vshrl.u32 %v497, 7
      %v499 = vsub.s32 %v496, %v498
      %v500 = vrot.slane %v493, %v499
      %v501 = vcombine.low %v500, %v500
      %v502 = vcombine.low %v313, %v313
      %503 = vrot.lane.b32.xlu0 %v501, 95
      %v504 = vpop.permute.xlu0 %503
      %505 = vrot.lane.b32.xlu0 %v502, 95
      %v506 = vpop.permute.xlu0 %505
      %507 = vrot.lane.b32.xlu0 %v500, 95
      %v508 = vpop.permute.xlu0 %507
      %vm509 = vcmask 777216
      %v510 = vsel %vm509, %v504, %v506
      %v511 = vsel %vm509, %v506, %v508
      %v514 = vunpack.c.l.s4 1966171168
      %v515 = vunpack.c.0.s8 %v514
      %v516 = vlaneseq
      %v517 = vshrl.u32 %v516, 7
      %v518 = vsub.s32 %v515, %v517
      %v519 = vrot.slane %v266, %v518
      %v520 = vcombine.high %v519, %v519
      %v522 = vunpack.c.l.s4 1966171168
      %v523 = vunpack.c.0.s8 %v522
      %v524 = vlaneseq
      %v525 = vshrl.u32 %v524, 7
      %v526 = vsub.s32 %v523, %v525
      %v527 = vrot.slane %v519, %v526
      %v529 = vunpack.c.l.s4 1966171168
      %v530 = vunpack.c.0.s8 %v529
      %v531 = vlaneseq
      %v532 = vshrl.u32 %v531, 7
      %v533 = vsub.s32 %v530, %v532
      %v534 = vrot.slane %v520, %v533
      %v535 = vcombine.high %v527, %v527
      %536 = vrot.lane.b32.xlu0 %v527, 94
      %v537 = vpop.permute.xlu0 %536
      %538 = vrot.lane.b32.xlu0 %v534, 94
      %v539 = vpop.permute.xlu0 %538
      %540 = vrot.lane.b32.xlu0 %v535, 94
      %v541 = vpop.permute.xlu0 %540
      %vm542 = vcmask 769024
      %v543 = vsel %vm542, %v537, %v539
      %v544 = vsel %vm542, %v539, %v541
      %vm545 = vcmask 1040384
      %v548 = vsel %vm545, %v282, %v336
      %v551 = vsel %vm545, %v289, %v337
      %vm552 = vcmask 1041408
      %v554 = vsel %vm552, %v548, %v369
      %v556 = vsel %vm552, %v551, %v370
      %vm557 = vcmask 1042432
      %v559 = vsel %vm557, %v554, %v403
      %v561 = vsel %vm557, %v556, %v404
      %vm562 = vcmask 1043456
      %v564 = vsel %vm562, %v559, %v422
      %v566 = vsel %vm562, %v561, %v423
      %vm567 = vcmask 1044480
      %v569 = vsel %vm567, %v564, %v457
      %v571 = vsel %vm567, %v566, %v458
      %vm572 = vcmask 1045504
      %v574 = vsel %vm572, %v569, %v491
      %v576 = vsel %vm572, %v571, %v492
      %vm577 = vcmask 1046528
      %v579 = vsel %vm577, %v574, %v510
      %v582 = vsel %vm577, %v576, %v511
      %v586 = vsel %vm545, %v543, 1065369472
      %v589 = vsel %vm545, %v544, 1065369472
      %591 = vmatprep.subr.bf16.mxu0 %v582
      %592 = vmatpush1.bf16.xpose.msra.mxu0 %v579
      %593 = vmatprep.subr.bf16.mxu0 %v589
      %594 = vmatpush1.bf16.xpose.msra.mxu0 %v586
      %595 = vmatprep.subr.bf16.mxu0 0
      %596 = vmatpush1.bf16.xpose.msra.mxu0 0
      %597 = vmatprep.subr.bf16.mxu0 0
      %598 = vmatpush1.bf16.xpose.msra.mxu0 0
      %599 = vmatprep.subr.bf16.mxu0 0
      %600 = vmatpush1.bf16.xpose.msra.mxu0 0
      %601 = vmatprep.subr.bf16.mxu0 0
      %602 = vmatpush1.bf16.xpose.msra.mxu0 0
      %603 = vmatprep.subr.bf16.mxu0 0
      %604 = vmatpush1.bf16.xpose.msra.mxu0 0
      %605 = vmatprep.subr.bf16.mxu0 0
      %606 = vmatpush1.bf16.xpose.msra.mxu0 0
      %607 = vmatprep.subr.bf16.mxu0 0
      %608 = vmatpush1.bf16.xpose.msra.mxu0 0
      %609 = vmatprep.subr.bf16.mxu0 0
      %610 = vmatpush1.bf16.xpose.msra.mxu0 0
      %611 = vmatprep.subr.bf16.mxu0 0
      %612 = vmatpush1.bf16.xpose.msra.mxu0 0
      %613 = vmatprep.subr.bf16.mxu0 0
      %614 = vmatpush1.bf16.xpose.msra.mxu0 0
      %615 = vmatprep.subr.bf16.mxu0 0
      %616 = vmatpush1.bf16.xpose.msra.mxu0 0
      %617 = vmatprep.subr.bf16.mxu0 0
      %618 = vmatpush1.bf16.xpose.msra.mxu0 0
      %619 = vmatprep.subr.bf16.mxu0 0
      %620 = vmatpush1.bf16.xpose.msra.mxu0 0
      %621 = vmatprep.subr.bf16.mxu0 0
      %622 = vmatpush1.bf16.xpose.msra.mxu0 0
      %623 = vmatprep.mubr.bf16.mxu0 %v582
      %624 = vmatmul.mubr.bf16.gmra.mrb[0].mxu0 %v579
      %v625 = vpop.f32.mrb[0].mxu0
      %v626 = vadd.f32 0.0, %v625
      %v627 = vpop.f32.mrb[0].mxu0
      %v628 = vpop.f32.mrb[0].mxu0
      %v629 = vadd.f32 0.0, %v628
      %v630 = vpop.f32.mrb[0].mxu0
      %631 = vmatprep.mubr.bf16.mxu0 %v589
      %632 = vmatmul.mubr.bf16.gmra.mrb[0].mxu0 %v586
      %v633 = vpop.f32.mrb[0].mxu0
      %v634 = vadd.f32 0.0, %v633
      %v635 = vpop.f32.mrb[0].mxu0
      %v636 = vpop.f32.mrb[0].mxu0
      %v637 = vpop.f32.mrb[0].mxu0
      %638 = vdwg.mxu0
      %vm639 = vcmask 154624
      %640 = vst.msk [vmem:[%s140] sm:$0xff] %vm639, %v626
      %641 = vst.msk [vmem:[%s140 + $0x8] sm:$0xff] %vm639, %v629
      %vm642 = vcmask 149504
      %643 = vst.msk [vmem:[%s140 + $0x10] sm:$0x7] %vm642, %v634
      %p644 = scmp.lt.s32.totalorder %s13, 1
      %s645 = scalar_select %p644, %s13, 1
      %s646 = smul.addr %s645, 3
      %s647 = smul.addr %s646, 8
      %s648 = scalar_lea.vmem %s2, %s647
      // Predicated region
      $region29: #{conv_layer_forward.2} parent=27 // pred_check
        %p649 = pneg %p78
      $region30: #{conv_layer_forward.2} parent=27 // pred_check_branch
        %651 = sbr.rel (%p649) target = $region32
      $region31: #{conv_layer_forward.2} parent=27 // pred_region
        _
      $region32: #{conv_layer_forward.2} parent=27 // pred_fallthru
        _
    $region28: #{conv_layer_forward.2} parent=5 // pred_fallthru
      _
    %p652 = scmp.le.s32.totalorder 2, %s8
    // Predicated region
    $region33: #{conv_layer_forward.2} parent=5 // pred_check
      %p653 = pneg %p652
    $region34: #{conv_layer_forward.2} parent=5 // pred_check_branch
      %655 = sbr.rel (%p653) target = $region36
    $region35: #{conv_layer_forward.2} parent=5 // pred_region
      %s656 = ssub.s32 %s8, 2
      // Predicated region
      $region37: #{conv_layer_forward.2} parent=35 // pred_check
        %p657 = pneg %p84
      $region38: #{conv_layer_forward.2} parent=35 // pred_check_branch
        %659 = sbr.rel (%p657) target = $region40
      $region39: #{conv_layer_forward.2} parent=35 // pred_region
        %p660 = scmp.lt.s32.totalorder %s14, 1
        %s661 = scalar_select %p660, %s14, 1
        %s662 = smul.addr %s661, 3
        %s663 = smul.addr %s662, 8
        %s664 = scalar_lea.vmem %s2, %s663
      $region40: #{conv_layer_forward.2} parent=35 // pred_fallthru
        _
    $region36: #{conv_layer_forward.2} parent=5 // pred_fallthru
      _
  $region6: #{conv_layer_forward.2} parent=0 // loop_footer
    %s12 = sadd.s32 1, %s8
  $region7: #{conv_layer_forward.2} parent=0 // loop_footer_branch
    %7 = sbr.rel target = $region3
  $region8: #{conv_layer_forward.2} parent=0 // loop_exit
    _

// kernel: conv_layer_forward.3
$region0: #{conv_layer_forward.3}
  #allocation0 [shape = 'u32[]', space=smem, size = 0x4, offset = 0x4, fixed_abs, tag = 'smem constant byte address 0x4 - core index']
  #allocation1 [shape = 'u32[144,128]{1,0:T(1,128)}', space=vmem, size = 0x12000, scoped, tag = 'internal scratch']
  %s0 = inlined_call_operand.vmem [shape: bf16[8,18], index: 0, kind: input, shape index: {}]
  %s1 = inlined_call_operand.vmem [shape: f32[8,1], index: 1, kind: input, shape index: {}]
  %s2 = inlined_call_operand.vmem [shape: f32[8,1], index: 2, kind: input, shape index: {}]
  %s3 = inlined_call_operand.vmem [shape: bf16[2,2,290], index: 3, kind: input, shape index: {}]
  %s4 = inlined_call_operand.vmem [shape: bf16[2,256], index: 4, kind: input, shape index: {}]
  %s5 = inlined_call_operand.vmem [shape: f32[2,8,256], index: 5, kind: output, shape index: {}]
  %s6 = sld [smem:[#allocation0]]
  $region53: #{conv_layer_forward.3} parent=0
    _
  %s8 = ssub.s32 1, %s6
  %s9 = scalar_select 0, %s8, %s6
  loop: start=0, step=1, limit=4
  $region2: #{conv_layer_forward.3} parent=0 // loop_pre_header
    _
  $region3: #{conv_layer_forward.3} parent=0 // loop_header
    %s11 = sphi 0, %s15
    %p12 = scmp.ge.s32.totalorder %s11, 4
    %s19 = sphi 0, %s19
    %s21 = sphi 0, %s19
    %s22 = sphi 0, %s21
    %s36 = sphi 0, %s22
    %s40 = sphi 0, %s40
    %s42 = sphi 0, %s40
    %s43 = sphi 0, %s42
    %s57 = sphi 0, %s43
    %s61 = sphi 0, %s61
    %s63 = sphi 0, %s61
    %s64 = sphi 0, %s63
    %s78 = sphi 0, %s64
    %s84 = sphi 0, %s86
    %s87 = sphi 0, %s84
    %s88 = sphi 0, %s87
    %s104 = sphi 0, %s88
    %s108 = sphi 0, %s108
    %s110 = sphi 0, %s108
    %s111 = sphi 0, %s110
    %s125 = sphi 0, %s111
    %s131 = sphi 0, %s133
    %s134 = sphi 0, %s131
    %s135 = sphi 0, %s134
    %s151 = sphi 0, %s135
  $region4: #{conv_layer_forward.3} parent=0 // loop_header_branch
    %14 = sbr.rel (%p12) target = $region8
  $region5: #{conv_layer_forward.3} parent=0 // loop_body
    %s16 = ssub.s32 %s11, 1
    %s17 = ssub.s32 %s11, 2
    %s18 = sadd.s32 %s11, 1
    %s20 = sadd.s32 %s19, 1
    %p23 = scmp.eq.s32.totalorder %s11, 1
    %p24 = scmp.ne.s32.totalorder %s19, %s21
    %p25 = scmp.eq.s32.totalorder %s11, 0
    %p26 = por %p24, %p25
    %p27 = scmp.ne.s32.totalorder %s19, %s21
    %p28 = scmp.eq.s32.totalorder %s16, 1
    %p29 = por %p27, %p28
    %p30 = scmp.ne.s32.totalorder %s21, %s22
    %p31 = scmp.eq.s32.totalorder %s16, 0
    %p32 = por %p30, %p31
    %p33 = scmp.ne.s32.totalorder %s21, %s22
    %p34 = scmp.eq.s32.totalorder %s17, 1
    %p35 = por %p33, %p34
    %p37 = scmp.ne.s32.totalorder %s22, %s36
    %p38 = scmp.eq.s32.totalorder %s17, 0
    %p39 = por %p37, %p38
    %s41 = sadd.s32 %s40, 1
    %p44 = scmp.eq.s32.totalorder %s11, 1
    %p45 = scmp.ne.s32.totalorder %s40, %s42
    %p46 = scmp.eq.s32.totalorder %s11, 0
    %p47 = por %p45, %p46
    %p48 = scmp.ne.s32.totalorder %s40, %s42
    %p49 = scmp.eq.s32.totalorder %s16, 1
    %p50 = por %p48, %p49
    %p51 = scmp.ne.s32.totalorder %s42, %s43
    %p52 = scmp.eq.s32.totalorder %s16, 0
    %p53 = por %p51, %p52
    %p54 = scmp.ne.s32.totalorder %s42, %s43
    %p55 = scmp.eq.s32.totalorder %s17, 1
    %p56 = por %p54, %p55
    %p58 = scmp.ne.s32.totalorder %s43, %s57
    %p59 = scmp.eq.s32.totalorder %s17, 0
    %p60 = por %p58, %p59
    %s62 = sadd.s32 %s61, 1
    %p65 = scmp.eq.s32.totalorder %s11, 1
    %p66 = scmp.ne.s32.totalorder %s61, %s63
    %p67 = scmp.eq.s32.totalorder %s11, 0
    %p68 = por %p66, %p67
    %p69 = scmp.ne.s32.totalorder %s61, %s63
    %p70 = scmp.eq.s32.totalorder %s16, 1
    %p71 = por %p69, %p70
    %p72 = scmp.ne.s32.totalorder %s63, %s64
    %p73 = scmp.eq.s32.totalorder %s16, 0
    %p74 = por %p72, %p73
    %p75 = scmp.ne.s32.totalorder %s63, %s64
    %p76 = scmp.eq.s32.totalorder %s17, 1
    %p77 = por %p75, %p76
    %p79 = scmp.ne.s32.totalorder %s64, %s78
    %p80 = scmp.eq.s32.totalorder %s17, 0
    %p81 = por %p79, %p80
    %s82 = ssub.s32 %s11, %s18
    %p83 = scmp.eq.s32.totalorder %s82, 0
    %s85 = sadd.s32 %s84, 1
    %s86 = scalar_select %p83, %s84, %s85
    %p89 = pneg %p83
    %p90 = scmp.eq.s32.totalorder %s11, 1
    %p91 = por %p89, %p90
    %p92 = scmp.ne.s32.totalorder %s84, %s87
    %p93 = scmp.eq.s32.totalorder %s11, 0
    %p94 = por %p92, %p93
    %p95 = scmp.ne.s32.totalorder %s84, %s87
    %p96 = scmp.eq.s32.totalorder %s16, 1
    %p97 = por %p95, %p96
    %p98 = scmp.ne.s32.totalorder %s87, %s88
    %p99 = scmp.eq.s32.totalorder %s16, 0
    %p100 = por %p98, %p99
    %p101 = scmp.ne.s32.totalorder %s87, %s88
    %p102 = scmp.eq.s32.totalorder %s17, 1
    %p103 = por %p101, %p102
    %p105 = scmp.ne.s32.totalorder %s88, %s104
    %p106 = scmp.eq.s32.totalorder %s17, 0
    %p107 = por %p105, %p106
    %s109 = sadd.s32 %s108, 1
    %p112 = scmp.eq.s32.totalorder %s11, 1
    %p113 = scmp.ne.s32.totalorder %s108, %s110
    %p114 = scmp.eq.s32.totalorder %s11, 0
    %p115 = por %p113, %p114
    %p116 = scmp.ne.s32.totalorder %s108, %s110
    %p117 = scmp.eq.s32.totalorder %s16, 1
    %p118 = por %p116, %p117
    %p119 = scmp.ne.s32.totalorder %s110, %s111
    %p120 = scmp.eq.s32.totalorder %s16, 0
    %p121 = por %p119, %p120
    %p122 = scmp.ne.s32.totalorder %s110, %s111
    %p123 = scmp.eq.s32.totalorder %s17, 1
    %p124 = por %p122, %p123
    %p126 = scmp.ne.s32.totalorder %s111, %s125
    %p127 = scmp.eq.s32.totalorder %s17, 0
    %p128 = por %p126, %p127
    %s129 = ssub.s32 %s11, %s18
    %p130 = scmp.eq.s32.totalorder %s129, 0
    %s132 = sadd.s32 %s131, 1
    %s133 = scalar_select %p130, %s131, %s132
    %p136 = pneg %p130
    %p137 = scmp.eq.s32.totalorder %s11, 1
    %p138 = por %p136, %p137
    %p139 = scmp.ne.s32.totalorder %s131, %s134
    %p140 = scmp.eq.s32.totalorder %s11, 0
    %p141 = por %p139, %p140
    %p142 = scmp.ne.s32.totalorder %s131, %s134
    %p143 = scmp.eq.s32.totalorder %s16, 1
    %p144 = por %p142, %p143
    %p145 = scmp.ne.s32.totalorder %s134, %s135
    %p146 = scmp.eq.s32.totalorder %s16, 0
    %p147 = por %p145, %p146
    %p148 = scmp.ne.s32.totalorder %s134, %s135
    %p149 = scmp.eq.s32.totalorder %s17, 1
    %p150 = por %p148, %p149
    %p152 = scmp.ne.s32.totalorder %s135, %s151
    %p153 = scmp.eq.s32.totalorder %s17, 0
    %p154 = por %p152, %p153
    %p155 = scmp.le.s32.totalorder 1, %s11
    %p156 = scmp.lt.s32.totalorder %s11, 3
    %p157 = pnand %p155, %p156
    %p158 = pneg %p157
    // Predicated region
    $region9: #{conv_layer_forward.3} parent=5 // pred_check
      _
    $region10: #{conv_layer_forward.3} parent=5 // pred_check_branch
      %160 = sbr.rel (%p157) target = $region12
    $region11: #{conv_layer_forward.3} parent=5 // pred_region
      %s161 = ssub.s32 %s11, 1
      // Predicated region
      $region13: #{conv_layer_forward.3} parent=11 // pred_check
        %p162 = pneg %p32
      $region14: #{conv_layer_forward.3} parent=11 // pred_check_branch
        %164 = sbr.rel (%p162) target = $region16
      $region15: #{conv_layer_forward.3} parent=11 // pred_region
        _
      $region16: #{conv_layer_forward.3} parent=11 // pred_fallthru
        _
      // Predicated region
      $region17: #{conv_layer_forward.3} parent=11 // pred_check
        %p165 = pneg %p53
      $region18: #{conv_layer_forward.3} parent=11 // pred_check_branch
        %167 = sbr.rel (%p165) target = $region20
      $region19: #{conv_layer_forward.3} parent=11 // pred_region
        _
      $region20: #{conv_layer_forward.3} parent=11 // pred_fallthru
        _
      // Predicated region
      $region21: #{conv_layer_forward.3} parent=11 // pred_check
        %p168 = pneg %p74
      $region22: #{conv_layer_forward.3} parent=11 // pred_check_branch
        %170 = sbr.rel (%p168) target = $region24
      $region23: #{conv_layer_forward.3} parent=11 // pred_region
        _
      $region24: #{conv_layer_forward.3} parent=11 // pred_fallthru
        _
      // Predicated region
      $region25: #{conv_layer_forward.3} parent=11 // pred_check
        %p171 = pneg %p121
      $region26: #{conv_layer_forward.3} parent=11 // pred_check_branch
        %173 = sbr.rel (%p171) target = $region28
      $region27: #{conv_layer_forward.3} parent=11 // pred_region
        _
      $region28: #{conv_layer_forward.3} parent=11 // pred_fallthru
        _
    $region12: #{conv_layer_forward.3} parent=5 // pred_fallthru
      _
    %p174 = scmp.lt.s32.totalorder %s11, 2
    // Predicated region
    $region29: #{conv_layer_forward.3} parent=5 // pred_check
      %p175 = pneg %p174
    $region30: #{conv_layer_forward.3} parent=5 // pred_check_branch
      %177 = sbr.rel (%p175) target = $region32
    $region31: #{conv_layer_forward.3} parent=5 // pred_region
      // Predicated region
      $region33: #{conv_layer_forward.3} parent=31 // pred_check
        %p178 = pneg %p94
      $region34: #{conv_layer_forward.3} parent=31 // pred_check_branch
        %180 = sbr.rel (%p178) target = $region36
      $region35: #{conv_layer_forward.3} parent=31 // pred_region
        %p181 = scmp.lt.s32.totalorder %s11, 1
        %s182 = scalar_select %p181, %s11, 1
        %s183 = smul.addr %s182, 3
        %s184 = scalar_lea.vmem %s3, %s183
      $region36: #{conv_layer_forward.3} parent=31 // pred_fallthru
        _
    $region32: #{conv_layer_forward.3} parent=5 // pred_fallthru
      _
    %p185 = scmp.le.s32.totalorder 1, %s11
    %p186 = scmp.lt.s32.totalorder %s11, 3
    %p187 = pnand %p185, %p186
    %p188 = pneg %p187
    // Predicated region
    $region37: #{conv_layer_forward.3} parent=5 // pred_check
      _
    $region38: #{conv_layer_forward.3} parent=5 // pred_check_branch
      %190 = sbr.rel (%p187) target = $region40
    $region39: #{conv_layer_forward.3} parent=5 // pred_region
      %s191 = ssub.s32 %s11, 1
      %p192 = pneg %p32
      %p193 = pneg %p29
      %p194 = pneg %p53
      %p195 = pneg %p50
      %p196 = pneg %p74
      %p197 = pneg %p71
      %p198 = scmp.lt.s32.totalorder %s16, 1
      %s199 = scalar_select %p198, %s16, 1
      %s200 = smul.addr %s199, 3
      %s201 = scalar_lea.vmem %s3, %s200
      %p202 = pneg %p100
      %p203 = pneg %p97
      %p204 = pneg %p121
      %p205 = pneg %p118
      %p206 = pneg %p147
      %p207 = pneg %p144
      %p208 = scmp.lt.s32.totalorder %s16, 1
      %s209 = scalar_select %p208, %s16, 1
      %s210 = smul.addr %s209, 2
      %s211 = smul.addr %s210, 8
      %s212 = scalar_lea.vmem %s5, %s211
      %p213 = scmp.lt.s32.totalorder %s16, 1
      %s214 = scalar_select %p213, %s16, 1
      %s215 = smul.addr %s214, 3
      %s216 = scalar_lea.vmem %s3, %s215
      %p217 = scmp.lt.s32.totalorder %s16, 1
      %s218 = scalar_select %p217, %s16, 1
      %s219 = smul.addr %s218, 2
      %s220 = smul.addr %s219, 8
      %s221 = scalar_lea.vmem %s5, %s220
      %v223 = vld [vmem:[%s4] sm:$0x3]
      %v224 = vld [vmem:[%s0] sm:$0xf]
      %v225 = vld [vmem:[%s1] sm:$0xff]
      %v226 = vld [vmem:[%s2] sm:$0xff]
      %v227 = vld [vmem:[%s216] sm:$0x7]
      %v230 = vunpack.c.l.s4 1966171168
      %v231 = vunpack.c.0.s8 %v230
      %v232 = vlaneseq
      %v233 = vshrl.u32 %v232, 7
      %v234 = vsub.s32 %v231, %v233
      %v235 = vrot.slane %v223, %v234
      %v236 = vcombine.high %v235, %v235
      %v238 = vunpack.c.l.s4 1966171168
      %v239 = vunpack.c.0.s8 %v238
      %v240 = vlaneseq
      %v241 = vshrl.u32 %v240, 7
      %v242 = vsub.s32 %v239, %v241
      %v243 = vrot.slane %v235, %v242
      %v245 = vunpack.c.l.s4 1966171168
      %v246 = vunpack.c.0.s8 %v245
      %v247 = vlaneseq
      %v248 = vshrl.u32 %v247, 7
      %v249 = vsub.s32 %v246, %v248
      %v250 = vrot.slane %v236, %v249
      %v252 = vpack.i.b16 %v243, %v243
      %v254 = vlaneseq
      %v255 = vshrl.u32 %v254, 7
      %v256 = vsub.s32 0, %v255
      %v257 = vrot.slane %v252, %v256
      %v259 = vpack.i.b16 %v250, %v250
      %v261 = vlaneseq
      %v262 = vshrl.u32 %v261, 7
      %v263 = vsub.s32 0, %v262
      %v264 = vrot.slane %v259, %v263
      %v267 = vcombine.low %v257, %v264
      %v269 = vunpack.c.l.s4 1966171168
      %v270 = vunpack.c.0.s8 %v269
      %v271 = vlaneseq
      %v272 = vshrl.u32 %v271, 7
      %v273 = vsub.s32 %v270, %v272
      %v274 = vrot.slane %v267, %v273
      %v276 = vunpack.c.l.s4 1966171168
      %v277 = vunpack.c.0.s8 %v276
      %v278 = vlaneseq
      %v279 = vshrl.u32 %v278, 7
      %v280 = vsub.s32 %v277, %v279
      %v281 = vrot.slane %v274, %v280
      %v283 = vmul.bf16 %v227, %v281
      %v284 = vshrl.u32 %v243, 16
      %v285 = vpack.i.b16 %v284, %v284
      %v287 = vlaneseq
      %v288 = vshrl.u32 %v287, 7
      %v289 = vsub.s32 0, %v288
      %v290 = vrot.slane %v285, %v289
      %v291 = vshrl.u32 %v250, 16
      %v292 = vpack.i.b16 %v291, %v291
      %v294 = vlaneseq
      %v295 = vshrl.u32 %v294, 7
      %v296 = vsub.s32 0, %v295
      %v297 = vrot.slane %v292, %v296
      %v300 = vcombine.low %v290, %v297
      %v302 = vunpack.c.l.s4 1966171168
      %v303 = vunpack.c.0.s8 %v302
      %v304 = vlaneseq
      %v305 = vshrl.u32 %v304, 7
      %v306 = vsub.s32 %v303, %v305
      %v307 = vrot.slane %v300, %v306
      %v309 = vunpack.c.l.s4 1966171168
      %v310 = vunpack.c.0.s8 %v309
      %v311 = vlaneseq
      %v312 = vshrl.u32 %v311, 7
      %v313 = vsub.s32 %v310, %v312
      %v314 = vrot.slane %v307, %v313
      %315 = vrot.lane.b32.xlu0 %v314, 2
      %v316 = vpop.permute.xlu0 %315
      %v317 = vrot.slane %v316, 7
      %vm318 = vcmask 15360
      %v319 = vsel %vm318, %v317, %v316
      %v321 = vmul.bf16 %v227, %v319
      %322 = vrot.lane.b32.xlu0 %v281, 16
      %v323 = vpop.permute.xlu0 %322
      %v324 = vrot.slane %v323, 7
      %vm325 = vcmask 130048
      %v326 = vsel %vm325, %v324, %v323
      %v328 = vmul.bf16 %v227, %v326
      %329 = vrot.lane.b32.xlu0 %v314, 18
      %v330 = vpop.permute.xlu0 %329
      %v331 = vrot.slane %v330, 7
      %vm332 = vcmask 146432
      %v333 = vsel %vm332, %v331, %v330
      %v335 = vmul.bf16 %v227, %v333
      %336 = vrot.lane.b32.xlu0 %v281, 32
      %v337 = vpop.permute.xlu0 %336
      %v338 = vrot.slane %v337, 7
      %vm339 = vcmask 261120
      %v340 = vsel %vm339, %v338, %v337
      %v342 = vmul.bf16 %v227, %v340
      %343 = vrot.lane.b32.xlu0 %v314, 34
      %v344 = vpop.permute.xlu0 %343
      %v345 = vrot.slane %v344, 7
      %vm346 = vcmask 277504
      %v347 = vsel %vm346, %v345, %v344
      %v349 = vmul.bf16 %v227, %v347
      %v352 = vunpack.c.l.s4 1966171168
      %v353 = vunpack.c.0.s8 %v352
      %v354 = vlaneseq
      %v355 = vshrl.u32 %v354, 7
      %v356 = vsub.s32 %v353, %v355
      %v357 = vrot.slane %v283, %v356
      %v358 = vcombine.high %v357, %v357
      %v360 = vunpack.c.l.s4 1966171168
      %v361 = vunpack.c.0.s8 %v360
      %v362 = vlaneseq
      %v363 = vshrl.u32 %v362, 7
      %v364 = vsub.s32 %v361, %v363
      %v365 = vrot.slane %v357, %v364
      %v367 = vunpack.c.l.s4 1966171168
      %v368 = vunpack.c.0.s8 %v367
      %v369 = vlaneseq
      %v370 = vshrl.u32 %v369, 7
      %v371 = vsub.s32 %v368, %v370
      %v372 = vrot.slane %v358, %v371
      %v374 = vcombine.low %v227, %v227
      %v376 = vunpack.c.l.s4 1966171168
      %v377 = vunpack.c.0.s8 %v376
      %v378 = vlaneseq
      %v379 = vshrl.u32 %v378, 7
      %v380 = vsub.s32 %v377, %v379
      %v381 = vrot.slane %v374, %v380
      %v383 = vunpack.c.l.s4 1966171168
      %v384 = vunpack.c.0.s8 %v383
      %v385 = vlaneseq
      %v386 = vshrl.u32 %v385, 7
      %v387 = vsub.s32 %v384, %v386
      %v388 = vrot.slane %v227, %v387
      %v389 = vcombine.high %v381, %v381
      %v391 = vunpack.c.l.s4 1966171168
      %v392 = vunpack.c.0.s8 %v391
      %v393 = vlaneseq
      %v394 = vshrl.u32 %v393, 7
      %v395 = vsub.s32 %v392, %v394
      %v396 = vrot.slane %v381, %v395
      %v398 = vunpack.c.l.s4 1966171168
      %v399 = vunpack.c.0.s8 %v398
      %v400 = vlaneseq
      %v401 = vshrl.u32 %v400, 7
      %v402 = vsub.s32 %v399, %v401
      %v403 = vrot.slane %v388, %v402
      %v405 = vunpack.c.l.s4 1966171168
      %v406 = vunpack.c.0.s8 %v405
      %v407 = vlaneseq
      %v408 = vshrl.u32 %v407, 7
      %v409 = vsub.s32 %v406, %v408
      %v410 = vrot.slane %v389, %v409
      %v411 = vcombine.high %v396, %v396
      %412 = vrot.lane.b32.xlu0 %v396, 127
      %v413 = vpop.permute.xlu0 %412
      %414 = vrot.lane.b32.xlu0 %v410, 127
      %v415 = vpop.permute.xlu0 %414
      %416 = vrot.lane.b32.xlu0 %v411, 127
      %v417 = vpop.permute.xlu0 %416
      %vm418 = vcmask 1039360
      %v419 = vsel %vm418, %v413, %v415
      %v420 = vsel %vm418, %v415, %v417
      %v423 = vunpack.c.l.s4 1966171168
      %v424 = vunpack.c.0.s8 %v423
      %v425 = vlaneseq
      %v426 = vshrl.u32 %v425, 7
      %v427 = vsub.s32 %v424, %v426
      %v428 = vrot.slane %v321, %v427
      %v429 = vcombine.low %v428, %v428
      %v431 = vunpack.c.l.s4 1966171168
      %v432 = vunpack.c.0.s8 %v431
      %v433 = vlaneseq
      %v434 = vshrl.u32 %v433, 7
      %v435 = vsub.s32 %v432, %v434
      %v436 = vrot.slane %v429, %v435
      %v438 = vunpack.c.l.s4 1966171168
      %v439 = vunpack.c.0.s8 %v438
      %v440 = vlaneseq
      %v441 = vshrl.u32 %v440, 7
      %v442 = vsub.s32 %v439, %v441
      %v443 = vrot.slane %v428, %v442
      %v444 = vcombine.high %v436, %v436
      %445 = vrot.lane.b32.xlu0 %v436, 126
      %v446 = vpop.permute.xlu0 %445
      %447 = vrot.lane.b32.xlu0 %v443, 126
      %v448 = vpop.permute.xlu0 %447
      %449 = vrot.lane.b32.xlu0 %v444, 126
      %v450 = vpop.permute.xlu0 %449
      %vm451 = vcmask 1031168
      %v452 = vsel %vm451, %v446, %v448
      %v453 = vsel %vm451, %v448, %v450
      %v455 = vcombine.low %v328, %v328
      %v457 = vunpack.c.l.s4 1966171168
      %v458 = vunpack.c.0.s8 %v457
      %v459 = vlaneseq
      %v460 = vshrl.u32 %v459, 7
      %v461 = vsub.s32 %v458, %v460
      %v462 = vrot.slane %v455, %v461
      %v463 = vcombine.low %v462, %v462
      %v465 = vunpack.c.l.s4 1966171168
      %v466 = vunpack.c.0.s8 %v465
      %v467 = vlaneseq
      %v468 = vshrl.u32 %v467, 7
      %v469 = vsub.s32 %v466, %v468
      %v470 = vrot.slane %v463, %v469
      %v472 = vunpack.c.l.s4 1966171168
      %v473 = vunpack.c.0.s8 %v472
      %v474 = vlaneseq
      %v475 = vshrl.u32 %v474, 7
      %v476 = vsub.s32 %v473, %v475
      %v477 = vrot.slane %v462, %v476
      %v478 = vcombine.high %v470, %v470
      %479 = vrot.lane.b32.xlu0 %v470, 112
      %v480 = vpop.permute.xlu0 %479
      %481 = vrot.lane.b32.xlu0 %v477, 112
      %v482 = vpop.permute.xlu0 %481
      %483 = vrot.lane.b32.xlu0 %v478, 112
      %v484 = vpop.permute.xlu0 %483
      %vm485 = vcmask 916480
      %v486 = vsel %vm485, %v480, %v482
      %v487 = vsel %vm485, %v482, %v484
      %v488 = vcombine.high %v388, %v388
      %v490 = vunpack.c.l.s4 1966171168
      %v491 = vunpack.c.0.s8 %v490
      %v492 = vlaneseq
      %v493 = vshrl.u32 %v492, 7
      %v494 = vsub.s32 %v491, %v493
      %v495 = vrot.slane %v488, %v494
      %v496 = vcombine.low %v403, %v403
      %v497 = vcombine.low %v495, %v495
      %498 = vrot.lane.b32.xlu0 %v496, 111
      %v499 = vpop.permute.xlu0 %498
      %500 = vrot.lane.b32.xlu0 %v497, 111
      %v501 = vpop.permute.xlu0 %500
      %502 = vrot.lane.b32.xlu0 %v403, 111
      %v503 = vpop.permute.xlu0 %502
      %vm504 = vcmask 908288
      %v505 = vsel %vm504, %v499, %v501
      %v506 = vsel %vm504, %v501, %v503
      %v508 = vcombine.low %v335, %v335
      %v510 = vunpack.c.l.s4 1966171168
      %v511 = vunpack.c.0.s8 %v510
      %v512 = vlaneseq
      %v513 = vshrl.u32 %v512, 7
      %v514 = vsub.s32 %v511, %v513
      %v515 = vrot.slane %v508, %v514
      %v516 = vcombine.high %v515, %v515
      %v518 = vunpack.c.l.s4 1966171168
      %v519 = vunpack.c.0.s8 %v518
      %v520 = vlaneseq
      %v521 = vshrl.u32 %v520, 7
      %v522 = vsub.s32 %v519, %v521
      %v523 = vrot.slane %v515, %v522
      %v525 = vunpack.c.l.s4 1966171168
      %v526 = vunpack.c.0.s8 %v525
      %v527 = vlaneseq
      %v528 = vshrl.u32 %v527, 7
      %v529 = vsub.s32 %v526, %v528
      %v530 = vrot.slane %v516, %v529
      %v531 = vcombine.low %v523, %v523
      %v532 = vcombine.low %v530, %v530
      %533 = vrot.lane.b32.xlu0 %v531, 110
      %v534 = vpop.permute.xlu0 %533
      %535 = vrot.lane.b32.xlu0 %v532, 110
      %v536 = vpop.permute.xlu0 %535
      %537 = vrot.lane.b32.xlu0 %v523, 110
      %v538 = vpop.permute.xlu0 %537
      %vm539 = vcmask 900096
      %v540 = vsel %vm539, %v534, %v536
      %v541 = vsel %vm539, %v536, %v538
      %v544 = vunpack.c.l.s4 1966171168
      %v545 = vunpack.c.0.s8 %v544
      %v546 = vlaneseq
      %v547 = vshrl.u32 %v546, 7
      %v548 = vsub.s32 %v545, %v547
      %v549 = vrot.slane %v342, %v548
      %v550 = vcombine.low %v549, %v549
      %v552 = vunpack.c.l.s4 1966171168
      %v553 = vunpack.c.0.s8 %v552
      %v554 = vlaneseq
      %v555 = vshrl.u32 %v554, 7
      %v556 = vsub.s32 %v553, %v555
      %v557 = vrot.slane %v550, %v556
      %v559 = vunpack.c.l.s4 1966171168
      %v560 = vunpack.c.0.s8 %v559
      %v561 = vlaneseq
      %v562 = vshrl.u32 %v561, 7
      %v563 = vsub.s32 %v560, %v562
      %v564 = vrot.slane %v549, %v563
      %v565 = vcombine.low %v557, %v557
      %v566 = vcombine.low %v564, %v564
      %567 = vrot.lane.b32.xlu0 %v565, 96
      %v568 = vpop.permute.xlu0 %567
      %569 = vrot.lane.b32.xlu0 %v566, 96
      %v570 = vpop.permute.xlu0 %569
      %571 = vrot.lane.b32.xlu0 %v557, 96
      %v572 = vpop.permute.xlu0 %571
      %vm573 = vcmask 785408
      %v574 = vsel %vm573, %v568, %v570
      %v575 = vsel %vm573, %v570, %v572
      %v576 = vcombine.low %v381, %v381
      %v578 = vunpack.c.l.s4 1966171168
      %v579 = vunpack.c.0.s8 %v578
      %v580 = vlaneseq
      %v581 = vshrl.u32 %v580, 7
      %v582 = vsub.s32 %v579, %v581
      %v583 = vrot.slane %v576, %v582
      %v584 = vcombine.low %v583, %v583
      %v585 = vcombine.low %v396, %v396
      %586 = vrot.lane.b32.xlu0 %v584, 95
      %v587 = vpop.permute.xlu0 %586
      %588 = vrot.lane.b32.xlu0 %v585, 95
      %v589 = vpop.permute.xlu0 %588
      %590 = vrot.lane.b32.xlu0 %v583, 95
      %v591 = vpop.permute.xlu0 %590
      %vm592 = vcmask 777216
      %v593 = vsel %vm592, %v587, %v589
      %v594 = vsel %vm592, %v589, %v591
      %v597 = vunpack.c.l.s4 1966171168
      %v598 = vunpack.c.0.s8 %v597
      %v599 = vlaneseq
      %v600 = vshrl.u32 %v599, 7
      %v601 = vsub.s32 %v598, %v600
      %v602 = vrot.slane %v349, %v601
      %v603 = vcombine.high %v602, %v602
      %v605 = vunpack.c.l.s4 1966171168
      %v606 = vunpack.c.0.s8 %v605
      %v607 = vlaneseq
      %v608 = vshrl.u32 %v607, 7
      %v609 = vsub.s32 %v606, %v608
      %v610 = vrot.slane %v602, %v609
      %v612 = vunpack.c.l.s4 1966171168
      %v613 = vunpack.c.0.s8 %v612
      %v614 = vlaneseq
      %v615 = vshrl.u32 %v614, 7
      %v616 = vsub.s32 %v613, %v615
      %v617 = vrot.slane %v603, %v616
      %v618 = vcombine.high %v610, %v610
      %619 = vrot.lane.b32.xlu0 %v610, 94
      %v620 = vpop.permute.xlu0 %619
      %621 = vrot.lane.b32.xlu0 %v617, 94
      %v622 = vpop.permute.xlu0 %621
      %623 = vrot.lane.b32.xlu0 %v618, 94
      %v624 = vpop.permute.xlu0 %623
      %vm625 = vcmask 769024
      %v626 = vsel %vm625, %v620, %v622
      %v627 = vsel %vm625, %v622, %v624
      %vm628 = vcmask 1040384
      %v631 = vsel %vm628, %v365, %v419
      %v634 = vsel %vm628, %v372, %v420
      %vm635 = vcmask 1041408
      %v637 = vsel %vm635, %v631, %v452
      %v639 = vsel %vm635, %v634, %v453
      %vm640 = vcmask 1042432
      %v642 = vsel %vm640, %v637, %v486
      %v644 = vsel %vm640, %v639, %v487
      %vm645 = vcmask 1043456
      %v647 = vsel %vm645, %v642, %v505
      %v649 = vsel %vm645, %v644, %v506
      %vm650 = vcmask 1044480
      %v652 = vsel %vm650, %v647, %v540
      %v654 = vsel %vm650, %v649, %v541
      %vm655 = vcmask 1045504
      %v657 = vsel %vm655, %v652, %v574
      %v659 = vsel %vm655, %v654, %v575
      %vm660 = vcmask 1046528
      %v662 = vsel %vm660, %v657, %v593
      %v665 = vsel %vm660, %v659, %v594
      %vm667 = vcmask 146432
      %v669 = vsel %vm667, %v224, 0
      %v672 = vsel %vm628, %v626, 0
      %v675 = vsel %vm628, %v627, 0
      %677 = vmatprep.subr.bf16.mxu0 %v665
      %678 = vmatpush1.bf16.msra.mxu0 %v662
      %679 = vmatprep.subr.bf16.mxu0 %v675
      %680 = vmatpush1.bf16.msra.mxu0 %v672
      %681 = vmatprep.subr.bf16.mxu0 0
      %682 = vmatpush1.bf16.msra.mxu0 0
      %683 = vmatprep.subr.bf16.mxu0 0
      %684 = vmatpush1.bf16.msra.mxu0 0
      %685 = vmatprep.subr.bf16.mxu0 0
      %686 = vmatpush1.bf16.msra.mxu0 0
      %687 = vmatprep.subr.bf16.mxu0 0
      %688 = vmatpush1.bf16.msra.mxu0 0
      %689 = vmatprep.subr.bf16.mxu0 0
      %690 = vmatpush1.bf16.msra.mxu0 0
      %691 = vmatprep.subr.bf16.mxu0 0
      %692 = vmatpush1.bf16.msra.mxu0 0
      %693 = vmatprep.subr.bf16.mxu0 0
      %694 = vmatpush1.bf16.msra.mxu0 0
      %695 = vmatprep.subr.bf16.mxu0 0
      %696 = vmatpush1.bf16.msra.mxu0 0
      %697 = vmatprep.subr.bf16.mxu0 0
      %698 = vmatpush1.bf16.msra.mxu0 0
      %699 = vmatprep.subr.bf16.mxu0 0
      %700 = vmatpush1.bf16.msra.mxu0 0
      %701 = vmatprep.subr.bf16.mxu0 0
      %702 = vmatpush1.bf16.msra.mxu0 0
      %703 = vmatprep.subr.bf16.mxu0 0
      %704 = vmatpush1.bf16.msra.mxu0 0
      %705 = vmatprep.subr.bf16.mxu0 0
      %706 = vmatpush1.bf16.msra.mxu0 0
      %707 = vmatprep.subr.bf16.mxu0 0
      %708 = vmatpush1.bf16.msra.mxu0 0
      %709 = vmatprep.mubr.bf16.mxu0 0
      %710 = vmatmul.mubr.bf16.gmra.mrb[0].mxu0 %v669
      %v711 = vpop.f32.mrb[0].mxu0
      %v712 = vadd.f32 0.0, %v711
      %v713 = vpop.f32.mrb[0].mxu0
      %v714 = vadd.f32 0.0, %v713
      %v715 = vpop.f32.mrb[0].mxu0
      %v716 = vpop.f32.mrb[0].mxu0
      %717 = vdwg.mxu0
      %719 = vset.pattern.permute.xlu0 0
      %720 = vperm.xlu0 %719, %v225
      %v721 = vpop.permute.xlu0 %720
      %v723 = vmul.f32 %v712, %v721
      %v724 = vmul.f32 %v714, %v721
      %726 = vset.pattern.permute.xlu0 0
      %727 = vperm.xlu0 %726, %v226
      %v728 = vpop.permute.xlu0 %727
      %v730 = vadd.f32 %v723, %v728
      %v731 = vadd.f32 %v724, %v728
      %v732 = vmax.f32 %v730, 0.0
      %v733 = vmax.f32 %v731, 0.0
      %734 = vst [vmem:[%s221] sm:$0xff] %v732
      %735 = vst [vmem:[%s221 + $0x8] sm:$0xff] %v733
      %p736 = scmp.lt.s32.totalorder %s16, 1
      %s737 = scalar_select %p736, %s16, 1
      %s738 = smul.addr %s737, 2
      %s739 = smul.addr %s738, 8
      %s740 = scalar_lea.vmem %s5, %s739
      // Predicated region
      $region41: #{conv_layer_forward.3} parent=39 // pred_check
        %p741 = pneg %p144
      $region42: #{conv_layer_forward.3} parent=39 // pred_check_branch
        %743 = sbr.rel (%p741) target = $region44
      $region43: #{conv_layer_forward.3} parent=39 // pred_region
        _
      $region44: #{conv_layer_forward.3} parent=39 // pred_fallthru
        _
    $region40: #{conv_layer_forward.3} parent=5 // pred_fallthru
      _
    %p744 = scmp.le.s32.totalorder 2, %s11
    // Predicated region
    $region45: #{conv_layer_forward.3} parent=5 // pred_check
      %p745 = pneg %p744
    $region46: #{conv_layer_forward.3} parent=5 // pred_check_branch
      %747 = sbr.rel (%p745) target = $region48
    $region47: #{conv_layer_forward.3} parent=5 // pred_region
      %s748 = ssub.s32 %s11, 2
      // Predicated region
      $region49: #{conv_layer_forward.3} parent=47 // pred_check
        %p749 = pneg %p150
      $region50: #{conv_layer_forward.3} parent=47 // pred_check_branch
        %751 = sbr.rel (%p749) target = $region52
      $region51: #{conv_layer_forward.3} parent=47 // pred_region
        %p752 = scmp.lt.s32.totalorder %s17, 1
        %s753 = scalar_select %p752, %s17, 1
        %s754 = smul.addr %s753, 2
        %s755 = smul.addr %s754, 8
        %s756 = scalar_lea.vmem %s5, %s755
      $region52: #{conv_layer_forward.3} parent=47 // pred_fallthru
        _
    $region48: #{conv_layer_forward.3} parent=5 // pred_fallthru
      _
  $region6: #{conv_layer_forward.3} parent=0 // loop_footer
    %s15 = sadd.s32 1, %s11
  $region7: #{conv_layer_forward.3} parent=0 // loop_footer_branch
    %10 = sbr.rel target = $region3
  $region8: #{conv_layer_forward.3} parent=0 // loop_exit
    _

</llo_original>
